<compile_context>
chip_gen: v7x
topology: tpu7x:2x2x1
jax: 0.10.0
libtpu: 0.0.40
codegen_flags: <defaults>
</compile_context>

<pallas_src>
import numpy as np
import jax
import jax.numpy as jnp
from jax import lax
from jax.experimental import pallas as pl
from jax.experimental.pallas import tpu as pltpu


def _dyn_roll(x, shift, axis, size):
    """np.roll(x, shift, axis) for a traced shift in [0, size).

    Barrel shifter built from static XLU rotates (pltpu.roll with compile-time
    shift amounts) blended with exact 0.0/1.0 scalar weights, so it lowers on
    every TPU generation. ceil(log2(size)) rotates; XLU slot is otherwise idle.
    """
    out = x
    step, bit = 1, 0
    while step < size:
        rolled = pltpu.roll(out, step, axis)
        t = ((shift >> bit) & 1).astype(x.dtype)      # exactly 0.0 or 1.0
        out = t * rolled + (1.0 - t) * out            # exact select (finite data)
        step *= 2
        bit += 1
    return out


def _pair_mse_kernel(nvalid_ref, dy_ref, dx_ref, a_ref, b_ref, loss_ref):
    """One grid step == one consecutive frame pair (i, i+1).

    nvalid_ref/dy_ref/dx_ref : SMEM (P,) i32 scalar-prefetch arrays
    a_ref    : VMEM (H, W) f32  rb channel of frame i   (read straight from pred)
    b_ref    : VMEM (H, W) f32  rb channel of frame i+1, un-rolled
    loss_ref : VMEM (1, 1) f32  accumulator -> mean of per-pair MSEs
    """
    i = pl.program_id(0)

    @pl.when(i == 0)
    def _init():
        loss_ref[...] = jnp.zeros_like(loss_ref)

    H, W = a_ref.shape
    a = a_ref[...]
    b = b_ref[...]

    # torch.roll(rb[i+1], (dy, dx), dims=(0, 1)) done on-chip (no extra HBM pass).
    b = _dyn_roll(b, dy_ref[i], axis=0, size=H)       # sublane (row) roll
    b = _dyn_roll(b, dx_ref[i], axis=1, size=W)       # lane (column) roll

    sq = (a - b) ** 2                                 # (H, W)

    # PyTorch's variable-width crop `[:, :-dx]` as a small (1, W) column mask.
    n_valid = nvalid_ref[i]
    col = lax.broadcasted_iota(jnp.int32, (1, W), 1)
    mask = (col < n_valid).astype(jnp.float32)

    # n_valid == 0 -> 0/0 = NaN, matching torch.mean of an empty slice.
    count = (n_valid * H).astype(jnp.float32)
    loss_ref[...] += (jnp.sum(sq * mask) / count).reshape(1, 1)

    @pl.when(i == pl.num_programs(0) - 1)
    def _finalize():
        loss_ref[...] = loss_ref[...] / jnp.asarray(pl.num_programs(0), jnp.float32)


@jax.jit
def temp_rb_forward(pred, odo):
    """JAX/Pallas port of Temp_rb.forward.

    pred : (B, C, H, W) float32
    odo  : (B, 2)       int32   per-frame (y, x) odometry
    returns (temp_loss, a_last, b_last) like the PyTorch module.
    """
    B, C, H, W = pred.shape
    if B < 2:
        raise ValueError("Temp_rb needs at least two frames (B >= 2).")
    num_pairs = B - 1
    rb_ch = C - 2

    pred = pred.astype(jnp.float32)
    odo = odo.astype(jnp.int32)

    dy = odo[1:, 0] - odo[:-1, 0]                         # (P,)
    dx = odo[1:, 1] - odo[:-1, 1]                         # (P,)

    # Columns kept by the PyTorch slice `[:, :-dx]` (also correct for dx<=0, |dx|>=W).
    n_valid = jnp.clip(jnp.where(dx > 0, W - dx, -dx), 0, W).astype(jnp.int32)
    dy_mod = jnp.mod(dy, H).astype(jnp.int32)
    dx_mod = jnp.mod(dx, W).astype(jnp.int32)

    frame_block = (pl.Squeezed(), pl.Squeezed(), H, W)    # kernel sees (H, W)

    loss = pl.pallas_call(
        _pair_mse_kernel,
        out_shape=jax.ShapeDtypeStruct((1, 1), jnp.float32),
        grid_spec=pltpu.PrefetchScalarGridSpec(
            num_scalar_prefetch=3,                        # n_valid, dy_mod, dx_mod -> SMEM
            grid=(num_pairs,),
            in_specs=[
                # rb channel of frame i, read directly from pred (no rb materialization)
                pl.BlockSpec(frame_block,
                             lambda i, nv, sdy, sdx: (i, rb_ch, 0, 0)),
                # rb channel of frame i+1 (un-rolled; roll happens in-kernel)
                pl.BlockSpec(frame_block,
                             lambda i, nv, sdy, sdx: (i + 1, rb_ch, 0, 0)),
            ],
            out_specs=pl.BlockSpec((1, 1), lambda i, nv, sdy, sdx: (0, 0)),
        ),
        compiler_params=pltpu.CompilerParams(
            dimension_semantics=("arbitrary",)),          # accumulator axis
    )(n_valid, dy_mod, dx_mod, pred, pred)

    temp_loss = loss[0, 0]
    a_last = pred[B - 2, rb_ch]                           # rb[-2] (zero-copy slice)
    b_last = jnp.roll(pred[B - 1, rb_ch], (dy[-1], dx[-1]), axis=(0, 1))  # one frame
    return temp_loss, a_last, b_last


def _reference(pred, odo):
    """NumPy reference replicating the PyTorch Temp_rb.forward exactly."""
    pred = np.asarray(pred)
    odo = np.asarray(odo)
    B, C, H, W = pred.shape
    rb = pred[:, -2]
    comps = []
    a = b = None
    for i in range(B - 1):
        dxi = int(odo[i + 1, 1] - odo[i, 1])
        dyi = int(odo[i + 1, 0] - odo[i, 0])
        a = rb[i]
        b = np.roll(rb[i + 1], (dyi, dxi), axis=(0, 1))
        comp = (a[:, :-dxi] - b[:, :-dxi]) ** 2
        comps.append(comp.mean())
    return float(np.mean(np.stack(comps))), a, b


if __name__ == "__main__":
    key = jax.random.PRNGKey(0)
    # W = 128 keeps the frame blocks lane-dense (vreg-native last dim) while small.
    B, C, H, W = 4, 4, 16, 128

    # TODO(synk): in the original pipeline `pred` comes from an upstream model
    # and `odo` from the dataset; deterministic synthetic stand-ins used here.
    pred = jax.random.normal(key, (B, C, H, W), dtype=jnp.float32)
    odo = jnp.array([[0, 0], [2, 3], [5, 4], [9, 10]], dtype=jnp.int32)  # (y, x)

    loss, a_out, b_out = temp_rb_forward(pred, odo)
    jax.block_until_ready((loss, a_out, b_out))

    ref_loss, ref_a, ref_b = _reference(pred, odo)
    assert np.allclose(np.asarray(loss), ref_loss, rtol=1e-5, atol=1e-6), (float(loss), ref_loss)
    assert np.allclose(np.asarray(a_out), ref_a, rtol=1e-6, atol=1e-6)
    assert np.allclose(np.asarray(b_out), ref_b, rtol=1e-6, atol=1e-6)

    print("KERNEL_OK")
</pallas_src>

<mosaic_0001>
module attributes {stable_mosaic.version = 11 : i64} {
  func.func @_pair_mse_kernel(%arg0: i32, %arg1: memref<3xi32, #tpu.memory_space<smem>>, %arg2: memref<3xi32, #tpu.memory_space<smem>>, %arg3: memref<3xi32, #tpu.memory_space<smem>>, %arg4: memref<1x1x16x128xf32, #tpu.memory_space<vmem>>, %arg5: memref<1x1x16x128xf32, #tpu.memory_space<vmem>>, %arg6: memref<1x1xf32, #tpu.memory_space<vmem>>) attributes {dimension_semantics = [#tpu.dimension_semantics<arbitrary>], iteration_bounds = array<i64: 3>, scalar_prefetch = 3 : i64, scratch_operands = 0 : i64, tpu.core_type = #tpu.core_type<tc>, window_params = [{transform_indices = @transform_0, window_bounds = array<i64: 1, 1, 16, 128>}, {transform_indices = @transform_1, window_bounds = array<i64: 1, 1, 16, 128>}, {pipeline_mode = #tpu.pipeline_mode<synchronous>, transform_indices = @transform_2, window_bounds = array<i64: 1, 1>}]} {
    %c0_i32 = arith.constant 0 : i32
    %0 = arith.cmpi eq, %arg0, %c0_i32 : i32
    %1 = arith.extui %0 : i1 to i32
    %c0_i32_0 = arith.constant 0 : i32
    %2 = arith.cmpi ne, %1, %c0_i32_0 : i32
    scf.if %2 {
      %cst_49 = arith.constant 0.000000e+00 : f32
      %146 = vector.broadcast %cst_49 : f32 to vector<1x1xf32>
      %c0_50 = arith.constant 0 : index
      %c0_51 = arith.constant 0 : index
      %147 = vector.load %arg6[%c0_50, %c0_51] : memref<1x1xf32, #tpu.memory_space<vmem>>, vector<1x1xf32>
      tpu.vector_store %arg6[%c0_50, %c0_51], %146 {strides = array<i32>} : memref<1x1xf32, #tpu.memory_space<vmem>>, vector<1x1xf32>,
    } else {
    }
    %c0 = arith.constant 0 : index
    %c0_1 = arith.constant 0 : index
    %c0_2 = arith.constant 0 : index
    %c0_3 = arith.constant 0 : index
    %3 = vector.load %arg4[%c0, %c0_1, %c0_2, %c0_3] : memref<1x1x16x128xf32, #tpu.memory_space<vmem>>, vector<1x1x16x128xf32>
    %4 = vector.shape_cast %3 : vector<1x1x16x128xf32> to vector<16x128xf32>
    %c0_4 = arith.constant 0 : index
    %c0_5 = arith.constant 0 : index
    %c0_6 = arith.constant 0 : index
    %c0_7 = arith.constant 0 : index
    %5 = vector.load %arg5[%c0_4, %c0_5, %c0_6, %c0_7] : memref<1x1x16x128xf32, #tpu.memory_space<vmem>>, vector<1x1x16x128xf32>
    %6 = vector.shape_cast %5 : vector<1x1x16x128xf32> to vector<16x128xf32>
    %7 = arith.index_cast %arg0 : i32 to index
    %8 = memref.load %arg2[%7] : memref<3xi32, #tpu.memory_space<smem>>
    %c1_i32 = arith.constant 1 : i32
    %9 = tpu.dynamic_rotate %6 by %c1_i32 dim 0 : vector<16x128xf32>, i32 -> vector<16x128xf32>
    %c0_i32_8 = arith.constant 0 : i32
    %10 = arith.shrsi %8, %c0_i32_8 : i32
    %c1_i32_9 = arith.constant 1 : i32
    %11 = arith.andi %10, %c1_i32_9 : i32
    %12 = arith.sitofp %11 : i32 to f32
    %13 = vector.broadcast %12 : f32 to vector<16x128xf32>
    %14 = arith.mulf %13, %9 : vector<16x128xf32>
    %cst = arith.constant 1.000000e+00 : f32
    %15 = arith.subf %cst, %12 : f32
    %16 = vector.broadcast %15 : f32 to vector<16x128xf32>
    %17 = arith.mulf %16, %6 : vector<16x128xf32>
    %18 = arith.addf %14, %17 : vector<16x128xf32>
    %c2_i32 = arith.constant 2 : i32
    %19 = tpu.dynamic_rotate %18 by %c2_i32 dim 0 : vector<16x128xf32>, i32 -> vector<16x128xf32>
    %c1_i32_10 = arith.constant 1 : i32
    %20 = arith.shrsi %8, %c1_i32_10 : i32
    %c1_i32_11 = arith.constant 1 : i32
    %21 = arith.andi %20, %c1_i32_11 : i32
    %22 = arith.sitofp %21 : i32 to f32
    %23 = vector.broadcast %22 : f32 to vector<16x128xf32>
    %24 = arith.mulf %23, %19 : vector<16x128xf32>
    %cst_12 = arith.constant 1.000000e+00 : f32
    %25 = arith.subf %cst_12, %22 : f32
    %26 = vector.broadcast %25 : f32 to vector<16x128xf32>
    %27 = arith.mulf %26, %18 : vector<16x128xf32>
    %28 = arith.addf %24, %27 : vector<16x128xf32>
    %c4_i32 = arith.constant 4 : i32
    %29 = tpu.dynamic_rotate %28 by %c4_i32 dim 0 : vector<16x128xf32>, i32 -> vector<16x128xf32>
    %c2_i32_13 = arith.constant 2 : i32
    %30 = arith.shrsi %8, %c2_i32_13 : i32
    %c1_i32_14 = arith.constant 1 : i32
    %31 = arith.andi %30, %c1_i32_14 : i32
    %32 = arith.sitofp %31 : i32 to f32
    %33 = vector.broadcast %32 : f32 to vector<16x128xf32>
    %34 = arith.mulf %33, %29 : vector<16x128xf32>
    %cst_15 = arith.constant 1.000000e+00 : f32
    %35 = arith.subf %cst_15, %32 : f32
    %36 = vector.broadcast %35 : f32 to vector<16x128xf32>
    %37 = arith.mulf %36, %28 : vector<16x128xf32>
    %38 = arith.addf %34, %37 : vector<16x128xf32>
    %c8_i32 = arith.constant 8 : i32
    %39 = tpu.dynamic_rotate %38 by %c8_i32 dim 0 : vector<16x128xf32>, i32 -> vector<16x128xf32>
    %c3_i32 = arith.constant 3 : i32
    %40 = arith.shrsi %8, %c3_i32 : i32
    %c1_i32_16 = arith.constant 1 : i32
    %41 = arith.andi %40, %c1_i32_16 : i32
    %42 = arith.sitofp %41 : i32 to f32
    %43 = vector.broadcast %42 : f32 to vector<16x128xf32>
    %44 = arith.mulf %43, %39 : vector<16x128xf32>
    %cst_17 = arith.constant 1.000000e+00 : f32
    %45 = arith.subf %cst_17, %42 : f32
    %46 = vector.broadcast %45 : f32 to vector<16x128xf32>
    %47 = arith.mulf %46, %38 : vector<16x128xf32>
    %48 = arith.addf %44, %47 : vector<16x128xf32>
    %49 = arith.index_cast %arg0 : i32 to index
    %50 = memref.load %arg3[%49] : memref<3xi32, #tpu.memory_space<smem>>
    %c1_i32_18 = arith.constant 1 : i32
    %51 = tpu.dynamic_rotate %48 by %c1_i32_18 dim 1 : vector<16x128xf32>, i32 -> vector<16x128xf32>
    %c0_i32_19 = arith.constant 0 : i32
    %52 = arith.shrsi %50, %c0_i32_19 : i32
    %c1_i32_20 = arith.constant 1 : i32
    %53 = arith.andi %52, %c1_i32_20 : i32
    %54 = arith.sitofp %53 : i32 to f32
    %55 = vector.broadcast %54 : f32 to vector<16x128xf32>
    %56 = arith.mulf %55, %51 : vector<16x128xf32>
    %cst_21 = arith.constant 1.000000e+00 : f32
    %57 = arith.subf %cst_21, %54 : f32
    %58 = vector.broadcast %57 : f32 to vector<16x128xf32>
    %59 = arith.mulf %58, %48 : vector<16x128xf32>
    %60 = arith.addf %56, %59 : vector<16x128xf32>
    %c2_i32_22 = arith.constant 2 : i32
    %61 = tpu.dynamic_rotate %60 by %c2_i32_22 dim 1 : vector<16x128xf32>, i32 -> vector<16x128xf32>
    %c1_i32_23 = arith.constant 1 : i32
    %62 = arith.shrsi %50, %c1_i32_23 : i32
    %c1_i32_24 = arith.constant 1 : i32
    %63 = arith.andi %62, %c1_i32_24 : i32
    %64 = arith.sitofp %63 : i32 to f32
    %65 = vector.broadcast %64 : f32 to vector<16x128xf32>
    %66 = arith.mulf %65, %61 : vector<16x128xf32>
    %cst_25 = arith.constant 1.000000e+00 : f32
    %67 = arith.subf %cst_25, %64 : f32
    %68 = vector.broadcast %67 : f32 to vector<16x128xf32>
    %69 = arith.mulf %68, %60 : vector<16x128xf32>
    %70 = arith.addf %66, %69 : vector<16x128xf32>
    %c4_i32_26 = arith.constant 4 : i32
    %71 = tpu.dynamic_rotate %70 by %c4_i32_26 dim 1 : vector<16x128xf32>, i32 -> vector<16x128xf32>
    %c2_i32_27 = arith.constant 2 : i32
    %72 = arith.shrsi %50, %c2_i32_27 : i32
    %c1_i32_28 = arith.constant 1 : i32
    %73 = arith.andi %72, %c1_i32_28 : i32
    %74 = arith.sitofp %73 : i32 to f32
    %75 = vector.broadcast %74 : f32 to vector<16x128xf32>
    %76 = arith.mulf %75, %71 : vector<16x128xf32>
    %cst_29 = arith.constant 1.000000e+00 : f32
    %77 = arith.subf %cst_29, %74 : f32
    %78 = vector.broadcast %77 : f32 to vector<16x128xf32>
    %79 = arith.mulf %78, %70 : vector<16x128xf32>
    %80 = arith.addf %76, %79 : vector<16x128xf32>
    %c8_i32_30 = arith.constant 8 : i32
    %81 = tpu.dynamic_rotate %80 by %c8_i32_30 dim 1 : vector<16x128xf32>, i32 -> vector<16x128xf32>
    %c3_i32_31 = arith.constant 3 : i32
    %82 = arith.shrsi %50, %c3_i32_31 : i32
    %c1_i32_32 = arith.constant 1 : i32
    %83 = arith.andi %82, %c1_i32_32 : i32
    %84 = arith.sitofp %83 : i32 to f32
    %85 = vector.broadcast %84 : f32 to vector<16x128xf32>
    %86 = arith.mulf %85, %81 : vector<16x128xf32>
    %cst_33 = arith.constant 1.000000e+00 : f32
    %87 = arith.subf %cst_33, %84 : f32
    %88 = vector.broadcast %87 : f32 to vector<16x128xf32>
    %89 = arith.mulf %88, %80 : vector<16x128xf32>
    %90 = arith.addf %86, %89 : vector<16x128xf32>
    %c16_i32 = arith.constant 16 : i32
    %91 = tpu.dynamic_rotate %90 by %c16_i32 dim 1 : vector<16x128xf32>, i32 -> vector<16x128xf32>
    %c4_i32_34 = arith.constant 4 : i32
    %92 = arith.shrsi %50, %c4_i32_34 : i32
    %c1_i32_35 = arith.constant 1 : i32
    %93 = arith.andi %92, %c1_i32_35 : i32
    %94 = arith.sitofp %93 : i32 to f32
    %95 = vector.broadcast %94 : f32 to vector<16x128xf32>
    %96 = arith.mulf %95, %91 : vector<16x128xf32>
    %cst_36 = arith.constant 1.000000e+00 : f32
    %97 = arith.subf %cst_36, %94 : f32
    %98 = vector.broadcast %97 : f32 to vector<16x128xf32>
    %99 = arith.mulf %98, %90 : vector<16x128xf32>
    %100 = arith.addf %96, %99 : vector<16x128xf32>
    %c32_i32 = arith.constant 32 : i32
    %101 = tpu.dynamic_rotate %100 by %c32_i32 dim 1 : vector<16x128xf32>, i32 -> vector<16x128xf32>
    %c5_i32 = arith.constant 5 : i32
    %102 = arith.shrsi %50, %c5_i32 : i32
    %c1_i32_37 = arith.constant 1 : i32
    %103 = arith.andi %102, %c1_i32_37 : i32
    %104 = arith.sitofp %103 : i32 to f32
    %105 = vector.broadcast %104 : f32 to vector<16x128xf32>
    %106 = arith.mulf %105, %101 : vector<16x128xf32>
    %cst_38 = arith.constant 1.000000e+00 : f32
    %107 = arith.subf %cst_38, %104 : f32
    %108 = vector.broadcast %107 : f32 to vector<16x128xf32>
    %109 = arith.mulf %108, %100 : vector<16x128xf32>
    %110 = arith.addf %106, %109 : vector<16x128xf32>
    %c64_i32 = arith.constant 64 : i32
    %111 = tpu.dynamic_rotate %110 by %c64_i32 dim 1 : vector<16x128xf32>, i32 -> vector<16x128xf32>
    %c6_i32 = arith.constant 6 : i32
    %112 = arith.shrsi %50, %c6_i32 : i32
    %c1_i32_39 = arith.constant 1 : i32
    %113 = arith.andi %112, %c1_i32_39 : i32
    %114 = arith.sitofp %113 : i32 to f32
    %115 = vector.broadcast %114 : f32 to vector<16x128xf32>
    %116 = arith.mulf %115, %111 : vector<16x128xf32>
    %cst_40 = arith.constant 1.000000e+00 : f32
    %117 = arith.subf %cst_40, %114 : f32
    %118 = vector.broadcast %117 : f32 to vector<16x128xf32>
    %119 = arith.mulf %118, %110 : vector<16x128xf32>
    %120 = arith.addf %116, %119 : vector<16x128xf32>
    %121 = arith.subf %4, %120 : vector<16x128xf32>
    %122 = arith.mulf %121, %121 : vector<16x128xf32>
    %123 = arith.index_cast %arg0 : i32 to index
    %124 = memref.load %arg1[%123] : memref<3xi32, #tpu.memory_space<smem>>
    %125 = tpu.iota {dimensions = array<i32: 1>} : vector<1x128xi32>
    %126 = vector.broadcast %124 : i32 to vector<1x128xi32>
    %127 = arith.cmpi slt, %125, %126 : vector<1x128xi32>
    %128 = arith.extui %127 : vector<1x128xi1> to vector<1x128xi32>
    %129 = arith.sitofp %128 : vector<1x128xi32> to vector<1x128xf32>
    %c16_i32_41 = arith.constant 16 : i32
    %130 = arith.muli %124, %c16_i32_41 : i32
    %131 = arith.sitofp %130 : i32 to f32
    %c0_42 = arith.constant 0 : index
    %c0_43 = arith.constant 0 : index
    %132 = vector.load %arg6[%c0_42, %c0_43] : memref<1x1xf32, #tpu.memory_space<vmem>>, vector<1x1xf32>
    %133 = vector.broadcast %129 : vector<1x128xf32> to vector<16x128xf32>
    %134 = arith.mulf %122, %133 : vector<16x128xf32>
    %135 = vector.shape_cast %134 : vector<16x128xf32> to vector<1x16x128xf32>
    %cst_44 = arith.constant dense<0.000000e+00> : vector<1xf32>
    %136 = vector.multi_reduction <add>, %135, %cst_44 [1, 2] : vector<1x16x128xf32> to vector<1xf32>
    %137 = vector.shape_cast %136 : vector<1xf32> to vector<1x1x1xf32>
    %138 = vector.extract %137[0, 0, 0] : f32 from vector<1x1x1xf32>
    %139 = arith.divf %138, %131 : f32
    %140 = vector.broadcast %139 : f32 to vector<1x1xf32>
    %141 = arith.addf %132, %140 : vector<1x1xf32>
    %c0_45 = arith.constant 0 : index
    %c0_46 = arith.constant 0 : index
    %142 = vector.load %arg6[%c0_45, %c0_46] : memref<1x1xf32, #tpu.memory_space<vmem>>, vector<1x1xf32>
    tpu.vector_store %arg6[%c0_45, %c0_46], %141 {strides = array<i32>} : memref<1x1xf32, #tpu.memory_space<vmem>>, vector<1x1xf32>,
    %c2_i32_47 = arith.constant 2 : i32
    %143 = arith.cmpi eq, %arg0, %c2_i32_47 : i32
    %144 = arith.extui %143 : i1 to i32
    %c0_i32_48 = arith.constant 0 : i32
    %145 = arith.cmpi ne, %144, %c0_i32_48 : i32
    scf.if %145 {
      %c0_49 = arith.constant 0 : index
      %c0_50 = arith.constant 0 : index
      %146 = vector.load %arg6[%c0_49, %c0_50] : memref<1x1xf32, #tpu.memory_space<vmem>>, vector<1x1xf32>
      %cst_51 = arith.constant 3.000000e+00 : f32
      %147 = vector.broadcast %cst_51 : f32 to vector<1x1xf32>
      %148 = arith.divf %146, %147 : vector<1x1xf32>
      %c0_52 = arith.constant 0 : index
      %c0_53 = arith.constant 0 : index
      %149 = vector.load %arg6[%c0_52, %c0_53] : memref<1x1xf32, #tpu.memory_space<vmem>>, vector<1x1xf32>
      tpu.vector_store %arg6[%c0_52, %c0_53], %148 {strides = array<i32>} : memref<1x1xf32, #tpu.memory_space<vmem>>, vector<1x1xf32>,
    } else {
    }
    return
  }
  func.func @transform_0(%arg0: i32, %arg1: memref<3xi32, #tpu.memory_space<smem>>, %arg2: memref<3xi32, #tpu.memory_space<smem>>, %arg3: memref<3xi32, #tpu.memory_space<smem>>) -> (i32, i32, i32, i32) {
    %c2_i32 = arith.constant 2 : i32
    %c0_i32 = arith.constant 0 : i32
    %c0_i32_0 = arith.constant 0 : i32
    %c0_i32_1 = arith.constant 0 : i32
    return %arg0, %c2_i32, %c0_i32, %c0_i32_0 : i32, i32, i32, i32
  }
  func.func @transform_1(%arg0: i32, %arg1: memref<3xi32, #tpu.memory_space<smem>>, %arg2: memref<3xi32, #tpu.memory_space<smem>>, %arg3: memref<3xi32, #tpu.memory_space<smem>>) -> (i32, i32, i32, i32) {
    %c1_i32 = arith.constant 1 : i32
    %0 = arith.addi %arg0, %c1_i32 : i32
    %c2_i32 = arith.constant 2 : i32
    %c0_i32 = arith.constant 0 : i32
    %c0_i32_0 = arith.constant 0 : i32
    %c0_i32_1 = arith.constant 0 : i32
    return %0, %c2_i32, %c0_i32, %c0_i32_0 : i32, i32, i32, i32
  }
  func.func @transform_2(%arg0: i32, %arg1: memref<3xi32, #tpu.memory_space<smem>>, %arg2: memref<3xi32, #tpu.memory_space<smem>>, %arg3: memref<3xi32, #tpu.memory_space<smem>>) -> (i32, i32) {
    %c0_i32 = arith.constant 0 : i32
    %c0_i32_0 = arith.constant 0 : i32
    %c0_i32_1 = arith.constant 0 : i32
    return %c0_i32, %c0_i32_0 : i32, i32
  }
}

</mosaic_0001>

<llo_original>
// kernel: temp_rb_forward.1
$region0: #{temp_rb_forward.1}
  #allocation0 [shape = 'u32[]', space=smem, size = 0x4, offset = 0x4, fixed_abs, tag = 'smem constant byte address 0x4 - core index']
  #allocation1 [shape = 'u32[144,128]{1,0:T(1,128)}', space=vmem, size = 0x12000, scoped, tag = 'internal scratch']
  #allocation2 [shape = 's32[1]{0}', space=sflag, size = 0x4, scoped, tag = 'scoped memory for temp_rb_forward.1']
  #allocation3 [shape = 'u8[512]{0}', space=smem, size = 0x200, scoped, tag = 'prefetched SMEM operand 0']
  #allocation4 [shape = 'u8[512]{0}', space=smem, size = 0x200, scoped, tag = 'prefetched SMEM operand 1']
  #allocation5 [shape = 'u8[512]{0}', space=smem, size = 0x200, scoped, tag = 'prefetched SMEM operand 2']
  %s0 = inlined_call_operand.vmem [shape: s32[3], index: 0, kind: input, shape index: {}]
  %s1 = inlined_call_operand.vmem [shape: s32[3], index: 1, kind: input, shape index: {}]
  %s2 = inlined_call_operand.vmem [shape: s32[3], index: 2, kind: input, shape index: {}]
  %s3 = inlined_call_operand.hbm [shape: f32[4,4,16,128], index: 3, kind: input, shape index: {}, may-alias: {3,4}]
  %s4 = inlined_call_operand.hbm [shape: f32[4,4,16,128], index: 4, kind: input, shape index: {}, may-alias: {3,4}]
  %s5 = inlined_call_operand.hbm [shape: f32[1,1], index: 5, kind: output, shape index: {}]
  %s6 = sld [smem:[#allocation0]]
  $region57: #{temp_rb_forward.1} parent=0
    _
  %s8 = ssub.s32 1, %s6
  %s9 = scalar_select 0, %s8, %s6
  %s10 = sshll.u32 %s0, 4
  %s11 = int_to_ptr.vmem [resolvable:$true] %s10
  %13 = dma.vmem_to_smem %s11, 16, [#allocation3], [#allocation2]
  %s14 = sshll.u32 %s1, 4
  %s15 = int_to_ptr.vmem [resolvable:$true] %s14
  %17 = dma.vmem_to_smem %s15, 16, [#allocation4], [#allocation2]
  %s18 = sshll.u32 %s2, 4
  %s19 = int_to_ptr.vmem [resolvable:$true] %s18
  %21 = dma.vmem_to_smem %s19, 16, [#allocation5], [#allocation2]
  %22 = dma.done [#allocation2], 48
  %23 = sfence
  $region1: #{temp_rb_forward.1} parent=0
    #allocation6 [shape = 'u8[16384]{0}', space=vmem, size = 0x4000, scoped, tag = 'input window, operand 3']
    #allocation7 [shape = 's32[2]{0}', space=sflag, size = 0x8, scoped, tag = 'scoped memory for temp_rb_forward.1']
    #allocation8 [shape = 's32[2]{0}', space=sflag, size = 0x8, scoped, tag = 'scoped memory for temp_rb_forward.1']
    #allocation9 [shape = 'u8[16384]{0}', space=vmem, size = 0x4000, scoped, tag = 'input window, operand 4']
    #allocation10 [shape = 's32[2]{0}', space=sflag, size = 0x8, scoped, tag = 'scoped memory for temp_rb_forward.1']
    #allocation11 [shape = 'u8[512]{0}', space=vmem, size = 0x400, scoped, tag = 'output window, operand 0, single buffered']
    %24 = vsyncpa [#allocation7], 0
    %s25 = scalar_lea.sflag [#allocation7], 1
    %26 = vsyncpa %s25, 0
    %27 = vsyncpa [#allocation10], 0
    %s28 = scalar_lea.sflag [#allocation10], 1
    %29 = vsyncpa %s28, 0
    %30 = vsyncpa [#allocation8], 0
    loop: start=0, step=1, limit=5
    $region2: #{temp_rb_forward.1} parent=1 // loop_pre_header
      _
    $region3: #{temp_rb_forward.1} parent=1 // loop_header
      %s32 = sphi 0, %s36
      %p33 = scmp.ge.s32.totalorder %s32, 5
      %s42 = sphi 0, %s44
      %s45 = sphi 0, %s42
      %s46 = sphi 0, %s45
      %s62 = sphi 0, %s46
      %s70 = sphi 0, %s72
      %s73 = sphi 0, %s70
      %s74 = sphi 0, %s73
      %s90 = sphi 0, %s74
      %s94 = sphi 0, %s94
      %s96 = sphi 0, %s94
      %s97 = sphi 0, %s96
      %s111 = sphi 0, %s97
    $region4: #{temp_rb_forward.1} parent=1 // loop_header_branch
      %35 = sbr.rel (%p33) target = $region8
    $region5: #{temp_rb_forward.1} parent=1 // loop_body
      %s37 = ssub.s32 %s32, 1
      %s38 = ssub.s32 %s32, 2
      %s39 = sadd.s32 %s32, 1
      %s40 = ssub.s32 %s32, %s39
      %p41 = scmp.eq.s32.totalorder %s40, 0
      %s43 = sadd.s32 %s42, 1
      %s44 = scalar_select %p41, %s42, %s43
      %p47 = pneg %p41
      %p48 = scmp.eq.s32.totalorder %s32, 2
      %p49 = por %p47, %p48
      %p50 = scmp.ne.s32.totalorder %s42, %s45
      %p51 = scmp.eq.s32.totalorder %s32, 0
      %p52 = por %p50, %p51
      %p53 = scmp.ne.s32.totalorder %s42, %s45
      %p54 = scmp.eq.s32.totalorder %s37, 2
      %p55 = por %p53, %p54
      %p56 = scmp.ne.s32.totalorder %s45, %s46
      %p57 = scmp.eq.s32.totalorder %s37, 0
      %p58 = por %p56, %p57
      %p59 = scmp.ne.s32.totalorder %s45, %s46
      %p60 = scmp.eq.s32.totalorder %s38, 2
      %p61 = por %p59, %p60
      %p63 = scmp.ne.s32.totalorder %s46, %s62
      %p64 = scmp.eq.s32.totalorder %s38, 0
      %p65 = por %p63, %p64
      %s66 = sadd.s32 %s32, 1
      %s67 = sadd.s32 %s39, 1
      %s68 = ssub.s32 %s66, %s67
      %p69 = scmp.eq.s32.totalorder %s68, 0
      %s71 = sadd.s32 %s70, 1
      %s72 = scalar_select %p69, %s70, %s71
      %p75 = pneg %p69
      %p76 = scmp.eq.s32.totalorder %s32, 2
      %p77 = por %p75, %p76
      %p78 = scmp.ne.s32.totalorder %s70, %s73
      %p79 = scmp.eq.s32.totalorder %s32, 0
      %p80 = por %p78, %p79
      %p81 = scmp.ne.s32.totalorder %s70, %s73
      %p82 = scmp.eq.s32.totalorder %s37, 2
      %p83 = por %p81, %p82
      %p84 = scmp.ne.s32.totalorder %s73, %s74
      %p85 = scmp.eq.s32.totalorder %s37, 0
      %p86 = por %p84, %p85
      %p87 = scmp.ne.s32.totalorder %s73, %s74
      %p88 = scmp.eq.s32.totalorder %s38, 2
      %p89 = por %p87, %p88
      %p91 = scmp.ne.s32.totalorder %s74, %s90
      %p92 = scmp.eq.s32.totalorder %s38, 0
      %p93 = por %p91, %p92
      %s95 = sadd.s32 %s94, 1
      %p98 = scmp.eq.s32.totalorder %s32, 2
      %p99 = scmp.ne.s32.totalorder %s94, %s96
      %p100 = scmp.eq.s32.totalorder %s32, 0
      %p101 = por %p99, %p100
      %p102 = scmp.ne.s32.totalorder %s94, %s96
      %p103 = scmp.eq.s32.totalorder %s37, 2
      %p104 = por %p102, %p103
      %p105 = scmp.ne.s32.totalorder %s96, %s97
      %p106 = scmp.eq.s32.totalorder %s37, 0
      %p107 = por %p105, %p106
      %p108 = scmp.ne.s32.totalorder %s96, %s97
      %p109 = scmp.eq.s32.totalorder %s38, 2
      %p110 = por %p108, %p109
      %p112 = scmp.ne.s32.totalorder %s97, %s111
      %p113 = scmp.eq.s32.totalorder %s38, 0
      %p114 = por %p112, %p113
      %p115 = scmp.le.s32.totalorder 1, %s32
      %p116 = scmp.lt.s32.totalorder %s32, 4
      %p117 = pnand %p115, %p116
      %p118 = pneg %p117
      // Predicated region
      $region9: #{temp_rb_forward.1} parent=5 // pred_check
        _
      $region10: #{temp_rb_forward.1} parent=5 // pred_check_branch
        %120 = sbr.rel (%p117) target = $region12
      $region11: #{temp_rb_forward.1} parent=5 // pred_region
        %s121 = ssub.s32 %s32, 1
      $region12: #{temp_rb_forward.1} parent=5 // pred_fallthru
        _
      %p122 = scmp.lt.s32.totalorder %s32, 3
      // Predicated region
      $region13: #{temp_rb_forward.1} parent=5 // pred_check
        %p123 = pneg %p122
      $region14: #{temp_rb_forward.1} parent=5 // pred_check_branch
        %125 = sbr.rel (%p123) target = $region16
      $region15: #{temp_rb_forward.1} parent=5 // pred_region
        // Predicated region
        $region17: #{temp_rb_forward.1} parent=15 // pred_check
          %p126 = pneg %p52
        $region18: #{temp_rb_forward.1} parent=15 // pred_check_branch
          %128 = sbr.rel (%p126) target = $region20
        $region19: #{temp_rb_forward.1} parent=15 // pred_region
          %s129 = sand.u32 %s42, 1
          %s130 = scalar_lea.sflag [#allocation7], %s129
          %s131 = sand.u32 %s42, 1
          %s132 = smul.addr %s131, 16
          %s133 = scalar_lea.vmem [#allocation6], %s132
          %s135 = ssub.s32 256, 256
          %136 = vsyncadd %s130, %s135
          %s137 = smul.addr %s32, 8
          %s138 = sadd.s32 4, %s137
          %s139 = smul.addr %s138, 128
          %s140 = scalar_lea.hbm %s3, %s139
          %s141 = sshll.u32 %s133, 4
          %s142 = int_to_ptr.vmem [resolvable:$true] %s141
          %147 = dma.hbm_to_vmem [thread:$0]  %s140, 256, %s142, %s130, 128, 128, 8
        $region20: #{temp_rb_forward.1} parent=15 // pred_fallthru
          _
        // Predicated region
        $region21: #{temp_rb_forward.1} parent=15 // pred_check
          %p148 = pneg %p80
        $region22: #{temp_rb_forward.1} parent=15 // pred_check_branch
          %150 = sbr.rel (%p148) target = $region24
        $region23: #{temp_rb_forward.1} parent=15 // pred_region
          %s151 = sand.u32 %s70, 1
          %s152 = scalar_lea.sflag [#allocation10], %s151
          %s153 = sand.u32 %s70, 1
          %s154 = smul.addr %s153, 16
          %s155 = scalar_lea.vmem [#allocation9], %s154
          %s156 = sadd.s32 %s32, 1
          %s158 = ssub.s32 256, 256
          %159 = vsyncadd %s152, %s158
          %s160 = smul.addr %s156, 8
          %s161 = sadd.s32 4, %s160
          %s162 = smul.addr %s161, 128
          %s163 = scalar_lea.hbm %s4, %s162
          %s164 = sshll.u32 %s155, 4
          %s165 = int_to_ptr.vmem [resolvable:$true] %s164
          %170 = dma.hbm_to_vmem [thread:$0]  %s163, 256, %s165, %s152, 128, 128, 8
        $region24: #{temp_rb_forward.1} parent=15 // pred_fallthru
          _
      $region16: #{temp_rb_forward.1} parent=5 // pred_fallthru
        _
      %p171 = scmp.le.s32.totalorder 1, %s32
      %p172 = scmp.lt.s32.totalorder %s32, 4
      %p173 = pnand %p171, %p172
      %p174 = pneg %p173
      // Predicated region
      $region25: #{temp_rb_forward.1} parent=5 // pred_check
        _
      $region26: #{temp_rb_forward.1} parent=5 // pred_check_branch
        %176 = sbr.rel (%p173) target = $region28
      $region27: #{temp_rb_forward.1} parent=5 // pred_region
        %s177 = ssub.s32 %s32, 1
        %s178 = sand.u32 %s45, 1
        %s179 = scalar_lea.sflag [#allocation7], %s178
        %s180 = sand.u32 %s45, 1
        %s181 = smul.addr %s180, 16
        %s182 = scalar_lea.vmem [#allocation6], %s181
        // Predicated region
        $region29: #{temp_rb_forward.1} parent=27 // pred_check
          %p183 = pneg %p58
        $region30: #{temp_rb_forward.1} parent=27 // pred_check_branch
          %185 = sbr.rel (%p183) target = $region32
        $region31: #{temp_rb_forward.1} parent=27 // pred_region
          %186 = dma.done %s179, 256
        $region32: #{temp_rb_forward.1} parent=27 // pred_fallthru
          _
        %s187 = sand.u32 %s73, 1
        %s188 = scalar_lea.sflag [#allocation10], %s187
        %s189 = sand.u32 %s73, 1
        %s190 = smul.addr %s189, 16
        %s191 = scalar_lea.vmem [#allocation9], %s190
        // Predicated region
        $region33: #{temp_rb_forward.1} parent=27 // pred_check
          %p192 = pneg %p86
        $region34: #{temp_rb_forward.1} parent=27 // pred_check_branch
          %194 = sbr.rel (%p192) target = $region36
        $region35: #{temp_rb_forward.1} parent=27 // pred_region
          %195 = dma.done %s188, 256
        $region36: #{temp_rb_forward.1} parent=27 // pred_fallthru
          _
        %s196 = sand.u32 %s45, 1
        %s197 = scalar_lea.sflag [#allocation7], %s196
        %s198 = sand.u32 %s45, 1
        %s199 = smul.addr %s198, 16
        %s200 = scalar_lea.vmem [#allocation6], %s199
        %p201 = pneg %p58
        %p202 = pneg %p55
        %s203 = sand.u32 %s73, 1
        %s204 = scalar_lea.sflag [#allocation10], %s203
        %s205 = sand.u32 %s73, 1
        %s206 = smul.addr %s205, 16
        %s207 = scalar_lea.vmem [#allocation9], %s206
        %p208 = pneg %p86
        %p209 = pneg %p83
        %p210 = pneg %p107
        %p211 = pneg %p104
        %s212 = sadd.s32 %s37, 1
        %p213 = scmp.eq.s32.totalorder %s37, 0
        // Predicated region
        $region37: #{temp_rb_forward.1} parent=27 // pred_check
          %p214 = pneg %p213
        $region38: #{temp_rb_forward.1} parent=27 // pred_check_branch
          %216 = sbr.rel (%p214) target = $region40
        $region39: #{temp_rb_forward.1} parent=27 // pred_region
          %vm217 = vcmask 0
          %218 = vst.msk [vmem:[#allocation11] sm:$0x1] %vm217, 0.0
        $region40: #{temp_rb_forward.1} parent=27 // pred_fallthru
          _
        %v219 = vld [vmem:[%s182] sm:$0xff]
        %v220 = vld [vmem:[%s182 + $0x8] sm:$0xff]
        %v221 = vld [vmem:[%s191] sm:$0xff]
        %v222 = vld [vmem:[%s191 + $0x8] sm:$0xff]
        %s223 = sld [smem:[#allocation4 + %s37]]
        %v224 = vrot.slane %v221, 7
        %v225 = vrot.slane %v222, 7
        %v226 = vlaneseq
        %v227 = vshrl.u32 %v226, 7
        %vm228 = vcmp.lt.s32.totalorder %v227, 1
        %v229 = vsel %vm228, %v224, %v225
        %v230 = vsel %vm228, %v225, %v224
        %s231 = sand.u32 %s223, 1
        %s232 = scvt.s32.f32 %s231
        %v233 = vstv %s232
        %v234 = vmul.f32 %v233, %v230
        %v235 = vmul.f32 %v233, %v229
        %s236 = ssub.f32 1.0, %s232
        %v237 = vstv %s236
        %v238 = vmul.f32 %v237, %v221
        %v239 = vmul.f32 %v237, %v222
        %v240 = vadd.f32 %v234, %v238
        %v241 = vadd.f32 %v235, %v239
        %v242 = vrot.slane %v240, 6
        %v243 = vrot.slane %v241, 6
        %vm244 = vcmp.lt.s32.totalorder %v227, 2
        %v245 = vsel %vm244, %v242, %v243
        %v246 = vsel %vm244, %v243, %v242
        %s247 = sshra.s32 %s223, 1
        %s248 = sand.u32 %s247, 1
        %s249 = scvt.s32.f32 %s248
        %v250 = vstv %s249
        %v251 = vmul.f32 %v250, %v246
        %v252 = vmul.f32 %v250, %v245
        %s253 = ssub.f32 1.0, %s249
        %v254 = vstv %s253
        %v255 = vmul.f32 %v254, %v240
        %v256 = vmul.f32 %v254, %v241
        %v257 = vadd.f32 %v251, %v255
        %v258 = vadd.f32 %v252, %v256
        %v259 = vrot.slane %v257, 4
        %v260 = vrot.slane %v258, 4
        %vm261 = vcmp.lt.s32.totalorder %v227, 4
        %v262 = vsel %vm261, %v259, %v260
        %v263 = vsel %vm261, %v260, %v259
        %s264 = sshra.s32 %s223, 2
        %s265 = sand.u32 %s264, 1
        %s266 = scvt.s32.f32 %s265
        %v267 = vstv %s266
        %v268 = vmul.f32 %v267, %v263
        %v269 = vmul.f32 %v267, %v262
        %s270 = ssub.f32 1.0, %s266
        %v271 = vstv %s270
        %v272 = vmul.f32 %v271, %v257
        %v273 = vmul.f32 %v271, %v258
        %v274 = vadd.f32 %v268, %v272
        %v275 = vadd.f32 %v269, %v273
        %s276 = sshra.s32 %s223, 3
        %s277 = sand.u32 %s276, 1
        %s278 = scvt.s32.f32 %s277
        %v279 = vstv %s278
        %v280 = vmul.f32 %v279, %v275
        %v281 = vmul.f32 %v279, %v274
        %s282 = ssub.f32 1.0, %s278
        %v283 = vstv %s282
        %v284 = vmul.f32 %v283, %v274
        %v285 = vmul.f32 %v283, %v275
        %v286 = vadd.f32 %v280, %v284
        %v287 = vadd.f32 %v281, %v285
        %s288 = sld [smem:[#allocation5 + %s37]]
        %289 = vrot.lane.b32.xlu0 %v286, 1
        %v290 = vpop.permute.xlu0 %289
        %291 = vrot.lane.b32.xlu0 %v287, 1
        %v292 = vpop.permute.xlu0 %291
        %s293 = sand.u32 %s288, 1
        %s294 = scvt.s32.f32 %s293
        %v295 = vstv %s294
        %v296 = vmul.f32 %v295, %v290
        %v297 = vmul.f32 %v295, %v292
        %s298 = ssub.f32 1.0, %s294
        %v299 = vstv %s298
        %v300 = vmul.f32 %v299, %v286
        %v301 = vmul.f32 %v299, %v287
        %v302 = vadd.f32 %v296, %v300
        %v303 = vadd.f32 %v297, %v301
        %304 = vrot.lane.b32.xlu0 %v302, 2
        %v305 = vpop.permute.xlu0 %304
        %306 = vrot.lane.b32.xlu0 %v303, 2
        %v307 = vpop.permute.xlu0 %306
        %s308 = sshra.s32 %s288, 1
        %s309 = sand.u32 %s308, 1
        %s310 = scvt.s32.f32 %s309
        %v311 = vstv %s310
        %v312 = vmul.f32 %v311, %v305
        %v313 = vmul.f32 %v311, %v307
        %s314 = ssub.f32 1.0, %s310
        %v315 = vstv %s314
        %v316 = vmul.f32 %v315, %v302
        %v317 = vmul.f32 %v315, %v303
        %v318 = vadd.f32 %v312, %v316
        %v319 = vadd.f32 %v313, %v317
        %320 = vrot.lane.b32.xlu0 %v318, 4
        %v321 = vpop.permute.xlu0 %320
        %322 = vrot.lane.b32.xlu0 %v319, 4
        %v323 = vpop.permute.xlu0 %322
        %s324 = sshra.s32 %s288, 2
        %s325 = sand.u32 %s324, 1
        %s326 = scvt.s32.f32 %s325
        %v327 = vstv %s326
        %v328 = vmul.f32 %v327, %v321
        %v329 = vmul.f32 %v327, %v323
        %s330 = ssub.f32 1.0, %s326
        %v331 = vstv %s330
        %v332 = vmul.f32 %v331, %v318
        %v333 = vmul.f32 %v331, %v319
        %v334 = vadd.f32 %v328, %v332
        %v335 = vadd.f32 %v329, %v333
        %336 = vrot.lane.b32.xlu0 %v334, 8
        %v337 = vpop.permute.xlu0 %336
        %338 = vrot.lane.b32.xlu0 %v335, 8
        %v339 = vpop.permute.xlu0 %338
        %s340 = sshra.s32 %s288, 3
        %s341 = sand.u32 %s340, 1
        %s342 = scvt.s32.f32 %s341
        %v343 = vstv %s342
        %v344 = vmul.f32 %v343, %v337
        %v345 = vmul.f32 %v343, %v339
        %s346 = ssub.f32 1.0, %s342
        %v347 = vstv %s346
        %v348 = vmul.f32 %v347, %v334
        %v349 = vmul.f32 %v347, %v335
        %v350 = vadd.f32 %v344, %v348
        %v351 = vadd.f32 %v345, %v349
        %352 = vrot.lane.b32.xlu0 %v350, 16
        %v353 = vpop.permute.xlu0 %352
        %354 = vrot.lane.b32.xlu0 %v351, 16
        %v355 = vpop.permute.xlu0 %354
        %s356 = sshra.s32 %s288, 4
        %s357 = sand.u32 %s356, 1
        %s358 = scvt.s32.f32 %s357
        %v359 = vstv %s358
        %v360 = vmul.f32 %v359, %v353
        %v361 = vmul.f32 %v359, %v355
        %s362 = ssub.f32 1.0, %s358
        %v363 = vstv %s362
        %v364 = vmul.f32 %v363, %v350
        %v365 = vmul.f32 %v363, %v351
        %v366 = vadd.f32 %v360, %v364
        %v367 = vadd.f32 %v361, %v365
        %368 = vrot.lane.b32.xlu0 %v366, 32
        %v369 = vpop.permute.xlu0 %368
        %370 = vrot.lane.b32.xlu0 %v367, 32
        %v371 = vpop.permute.xlu0 %370
        %s372 = sshra.s32 %s288, 5
        %s373 = sand.u32 %s372, 1
        %s374 = scvt.s32.f32 %s373
        %v375 = vstv %s374
        %v376 = vmul.f32 %v375, %v369
        %v377 = vmul.f32 %v375, %v371
        %s378 = ssub.f32 1.0, %s374
        %v379 = vstv %s378
        %v380 = vmul.f32 %v379, %v366
        %v381 = vmul.f32 %v379, %v367
        %v382 = vadd.f32 %v376, %v380
        %v383 = vadd.f32 %v377, %v381
        %384 = vrot.lane.b32.xlu0 %v382, 64
        %v385 = vpop.permute.xlu0 %384
        %386 = vrot.lane.b32.xlu0 %v383, 64
        %v387 = vpop.permute.xlu0 %386
        %s388 = sshra.s32 %s288, 6
        %s389 = sand.u32 %s388, 1
        %s390 = scvt.s32.f32 %s389
        %v391 = vstv %s390
        %v392 = vmul.f32 %v391, %v385
        %v393 = vmul.f32 %v391, %v387
        %s394 = ssub.f32 1.0, %s390
        %v395 = vstv %s394
        %v396 = vmul.f32 %v395, %v382
        %v397 = vmul.f32 %v395, %v383
        %v398 = vadd.f32 %v392, %v396
        %v399 = vadd.f32 %v393, %v397
        %v400 = vsub.f32 %v219, %v398
        %v401 = vsub.f32 %v220, %v399
        %v402 = vmul.f32 %v400, %v400
        %v403 = vmul.f32 %v401, %v401
        %s404 = sld [smem:[#allocation3 + %s37]]
        %v405 = vlaneseq
        %v406 = vand.u32 %v405, 127
        %v407 = vstv %s404
        %vm408 = vcmp.lt.s32.totalorder %v406, %v407
        %v409 = vsel %vm408, 1, 0
        %v410 = vcvt.s32.f32 %v409
        %s411 = smul.u32 %s404, 16
        %s412 = scvt.s32.f32 %s411
        %v413 = vld [vmem:[#allocation11] sm:$0x1]
        %v414 = vmul.f32 %v402, %v410
        %v415 = vmul.f32 %v403, %v410
        %v416 = vadd.f32 %v414, %v415
        %417 = vadd.xlane.f32.xlu0 %v416
        %v418 = vpop.xlane.xlu0 %417
        %v419 = vrot.slane %v418, 4
        %v420 = vadd.f32 %v418, %v419
        %v421 = vrot.slane %v420, 2
        %v422 = vadd.f32 %v420, %v421
        %v423 = vrot.slane %v422, 1
        %v424 = vadd.f32 %v422, %v423
        %s425 = vtos %v424
        %v426 = vstv %s412
        %v427 = vrcp.pop %v426
        %s428 = vtos %v427
        %s429 = smul.f32 %s425, %s428
        %v430 = vstv %s429
        %v431 = vadd.f32 %v413, %v430
        %vm432 = vcmask 0
        %433 = vst.msk [vmem:[#allocation11] sm:$0x1] %vm432, %v431
        %p434 = scmp.eq.s32.totalorder %s37, 2
        // Predicated region
        $region41: #{temp_rb_forward.1} parent=27 // pred_check
          %p435 = pneg %p434
        $region42: #{temp_rb_forward.1} parent=27 // pred_check_branch
          %437 = sbr.rel (%p435) target = $region44
        $region43: #{temp_rb_forward.1} parent=27 // pred_region
          %v438 = vld [vmem:[#allocation11] sm:$0x1]
          %v439 = vrcp.pop 3.0
          %v440 = vmul.f32 %v438, %v439
          %441 = vst.msk [vmem:[#allocation11] sm:$0x1] %vm432, %v440
        $region44: #{temp_rb_forward.1} parent=27 // pred_fallthru
          _
        // Predicated region
        $region45: #{temp_rb_forward.1} parent=27 // pred_check
          %p442 = pneg %p104
        $region46: #{temp_rb_forward.1} parent=27 // pred_check_branch
          %444 = sbr.rel (%p442) target = $region48
        $region47: #{temp_rb_forward.1} parent=27 // pred_region
          %s446 = ssub.s32 16, 16
          %447 = vsyncadd [#allocation8], %s446
          %s449 = sshll.u32 [#allocation11], 4
          %s450 = int_to_ptr.vmem [resolvable:$true] %s449
          %452 = dma.vmem_to_hbm [thread:$0]  %s450, 16, %s5, [#allocation8]
        $region48: #{temp_rb_forward.1} parent=27 // pred_fallthru
          _
        // Predicated region
        $region49: #{temp_rb_forward.1} parent=27 // pred_check
          %p453 = pneg %p104
        $region50: #{temp_rb_forward.1} parent=27 // pred_check_branch
          %455 = sbr.rel (%p453) target = $region52
        $region51: #{temp_rb_forward.1} parent=27 // pred_region
          %456 = dma.done [#allocation8], 16
        $region52: #{temp_rb_forward.1} parent=27 // pred_fallthru
          _
      $region28: #{temp_rb_forward.1} parent=5 // pred_fallthru
        _
      %p457 = scmp.le.s32.totalorder 2, %s32
      // Predicated region
      $region53: #{temp_rb_forward.1} parent=5 // pred_check
        %p458 = pneg %p457
      $region54: #{temp_rb_forward.1} parent=5 // pred_check_branch
        %460 = sbr.rel (%p458) target = $region56
      $region55: #{temp_rb_forward.1} parent=5 // pred_region
        %s461 = ssub.s32 %s32, 2
      $region56: #{temp_rb_forward.1} parent=5 // pred_fallthru
        _
    $region6: #{temp_rb_forward.1} parent=1 // loop_footer
      %s36 = sadd.s32 1, %s32
    $region7: #{temp_rb_forward.1} parent=1 // loop_footer_branch
      %31 = sbr.rel target = $region3
    $region8: #{temp_rb_forward.1} parent=1 // loop_exit
      _
    %462 = vsyncpa [#allocation7], 1
    %s463 = scalar_lea.sflag [#allocation7], 1
    %464 = vsyncpa %s463, 1
    %465 = vsyncpa [#allocation10], 1
    %s466 = scalar_lea.sflag [#allocation10], 1
    %467 = vsyncpa %s466, 1
    %468 = vsyncpa [#allocation8], 1
    %s469 = scalar_lea.sflag [#allocation8], 1
    %470 = vsyncpa %s469, 1

</llo_original>
